<compile_context>
chip_gen: v5e
topology: v5e:2x2
jax: 0.10.0
libtpu: 0.0.40
codegen_flags: <defaults>
</compile_context>

<pallas_src>
import jax
import jax.numpy as jnp
from jax.experimental import pallas as pl
from jax.experimental.pallas import tpu as pltpu


def _make_iou_kernel(B, TB):
    """Kernel over (TB, N) row blocks; accumulates sum_i (1 - IoU_i) into o_ref."""

    def kernel(p_ref, t_ref, o_ref):
        step = pl.program_id(0)

        @pl.when(step == 0)
        def _init():
            o_ref[...] = jnp.zeros_like(o_ref)

        p = p_ref[...].astype(jnp.float32)                 # (TB, N) in-kernel cast
        t = t_ref[...].astype(jnp.float32)

        # Two reductions instead of three: Ior = S - Iand.
        iand = jnp.sum(p * t, axis=1, keepdims=True)       # (TB, 1)
        s = jnp.sum(p + t, axis=1, keepdims=True)          # (TB, 1)
        ior = s - iand
        per_row = 1.0 - iand / ior                          # (TB, 1)

        if B % TB != 0:
            # Mask rows of the (padded) final block.
            row = jax.lax.broadcasted_iota(jnp.int32, (TB, 1), 0) + step * TB
            per_row = jnp.where(row < B, per_row, 0.0)

        o_ref[...] += jnp.sum(per_row)

    return kernel


def _choose_tb(B, N, itemsize):
    # Target ~2 MiB per input block: 2 inputs x 2 pipeline buffers x 2 MiB = 8 MiB,
    # comfortably under v5e's 16 MiB scoped-VMEM default (32 MiB on v6e/v7x).
    target_bytes = 2 * 1024 * 1024
    tb = max(1, target_bytes // max(1, N * itemsize))
    if tb < B:
        tb = max(8, (tb // 8) * 8)   # sublane-aligned chunks when splitting B
    if tb >= B:
        tb = B                       # full-extent block is always layout-legal
    return tb


def _patch_iou_sum(pred_patch: jax.Array, target_patch: jax.Array) -> jax.Array:
    """sum_i (1 - IoU_i) over batch for one anchor patch, as a single Pallas call."""
    B = pred_patch.shape[0]
    N = 1
    for d in pred_patch.shape[1:]:
        N *= d

    # Fold C, Ph, Pw into one lane axis.  For the common (single anchor, full
    # extent) case the input was never sliced, so this reshape is a bitcast.
    p2 = pred_patch.reshape(B, N)
    t2 = target_patch.reshape(B, N)

    itemsize = jnp.dtype(pred_patch.dtype).itemsize
    TB = _choose_tb(B, N, itemsize)
    grid = (pl.cdiv(B, TB),)

    out = pl.pallas_call(
        _make_iou_kernel(B, TB),
        out_shape=jax.ShapeDtypeStruct((1, 128), jnp.float32),
        grid=grid,
        in_specs=[
            pl.BlockSpec((TB, N), lambda i: (i, 0)),
            pl.BlockSpec((TB, N), lambda i: (i, 0)),
        ],
        out_specs=pl.BlockSpec((1, 128), lambda i: (0, 0)),
        compiler_params=pltpu.CompilerParams(
            dimension_semantics=("arbitrary",)),
        cost_estimate=pl.CostEstimate(
            flops=5 * B * N,
            transcendentals=B,
            bytes_accessed=2 * B * N * itemsize + 4 * 128),
    )(p2, t2)
    return out[0, 0]


@jax.jit
def patch_iou_loss(pred: jax.Array, target: jax.Array) -> jax.Array:
    """JAX/Pallas equivalent of PatchIoULoss().forward(pred, target)."""
    B, C, H, W = target.shape
    win_y, win_x = 64, 64

    total = jnp.zeros((), jnp.float32)
    # Reference iterates anchors over target.shape[0] / target.shape[1]
    # (batch / channel extents, step 64) while slicing the spatial dims.
    for anchor_y in range(0, B, win_y):
        for anchor_x in range(0, C, win_y):
            y1 = min(anchor_y + win_y, H)
            x1 = min(anchor_x + win_x, W)
            if y1 <= anchor_y or x1 <= anchor_x:
                # TODO(synk): reference yields 0/0 = NaN for empty patches
                # (only reachable when B or C > 64 with small H/W); we skip.
                continue
            if anchor_y == 0 and y1 == H and anchor_x == 0 and x1 == W:
                pp, tp = pred, target          # no slice -> no extra HBM copy
            else:
                # TODO(synk): strict spatial slices (H or W > 64) still incur one
                # XLA slice copy before the kernel; an in-kernel x-window mask
                # over full-W blocks would avoid it.
                pp = pred[:, :, anchor_y:y1, anchor_x:x1]
                tp = target[:, :, anchor_y:y1, anchor_x:x1]

            total = total + _patch_iou_sum(pp, tp)
    return total


def _patch_iou_loss_ref(pred, target):
    """Pure-jnp reference for a correctness check."""
    B, C, H, W = target.shape
    win_y, win_x = 64, 64
    total = jnp.zeros((), jnp.float32)
    for ay in range(0, B, win_y):
        for ax in range(0, C, win_y):
            pp = pred[:, :, ay:ay + win_y, ax:ax + win_x].astype(jnp.float32)
            tp = target[:, :, ay:ay + win_y, ax:ax + win_x].astype(jnp.float32)
            if pp.size == 0:
                continue
            iand = jnp.sum(tp * pp, axis=(1, 2, 3))
            ior = jnp.sum(tp, axis=(1, 2, 3)) + jnp.sum(pp, axis=(1, 2, 3)) - iand
            total = total + jnp.sum(1.0 - iand / ior)
    return total


if __name__ == "__main__":
    key = jax.random.PRNGKey(0)
    k1, k2 = jax.random.split(key)
    B, C, H, W = 2, 4, 16, 16
    pred = jax.random.uniform(k1, (B, C, H, W), dtype=jnp.float32)
    target = jax.random.uniform(k2, (B, C, H, W), dtype=jnp.float32)

    loss = patch_iou_loss(pred, target)
    jax.block_until_ready(loss)
    assert loss.shape == ()

    ref = _patch_iou_loss_ref(pred, target)
    assert jnp.allclose(loss, ref, rtol=1e-4, atol=1e-4), (loss, ref)

    print("KERNEL_OK")
</pallas_src>

<mosaic_0001>
module attributes {stable_mosaic.version = 11 : i64} {
  func.func @kernel(%arg0: i32, %arg1: memref<2x1024xf32, #tpu.memory_space<vmem>>, %arg2: memref<2x1024xf32, #tpu.memory_space<vmem>>, %arg3: memref<1x128xf32, #tpu.memory_space<vmem>>) attributes {dimension_semantics = [#tpu.dimension_semantics<arbitrary>], iteration_bounds = array<i64: 1>, scalar_prefetch = 0 : i64, scratch_operands = 0 : i64, tpu.core_type = #tpu.core_type<tc>, window_params = [{transform_indices = @transform_0, window_bounds = array<i64: 2, 1024>}, {transform_indices = @transform_1, window_bounds = array<i64: 2, 1024>}, {pipeline_mode = #tpu.pipeline_mode<synchronous>, transform_indices = @transform_2, window_bounds = array<i64: 1, 128>}]} {
    %c0_i32 = arith.constant 0 : i32
    %0 = arith.cmpi eq, %arg0, %c0_i32 : i32
    %1 = arith.extui %0 : i1 to i32
    %c0_i32_0 = arith.constant 0 : i32
    %2 = arith.cmpi ne, %1, %c0_i32_0 : i32
    scf.if %2 {
      %cst_11 = arith.constant 0.000000e+00 : f32
      %23 = vector.broadcast %cst_11 : f32 to vector<1x128xf32>
      %c0_12 = arith.constant 0 : index
      %c0_13 = arith.constant 0 : index
      %24 = vector.load %arg3[%c0_12, %c0_13] : memref<1x128xf32, #tpu.memory_space<vmem>>, vector<1x128xf32>
      tpu.vector_store %arg3[%c0_12, %c0_13], %23 {strides = array<i32>} : memref<1x128xf32, #tpu.memory_space<vmem>>, vector<1x128xf32>,
    } else {
    }
    %c0 = arith.constant 0 : index
    %c0_1 = arith.constant 0 : index
    %3 = vector.load %arg1[%c0, %c0_1] : memref<2x1024xf32, #tpu.memory_space<vmem>>, vector<2x1024xf32>
    %c0_2 = arith.constant 0 : index
    %c0_3 = arith.constant 0 : index
    %4 = vector.load %arg2[%c0_2, %c0_3] : memref<2x1024xf32, #tpu.memory_space<vmem>>, vector<2x1024xf32>
    %5 = arith.mulf %3, %4 : vector<2x1024xf32>
    %cst = arith.constant dense<0.000000e+00> : vector<2xf32>
    %6 = vector.multi_reduction <add>, %5, %cst [1] : vector<2x1024xf32> to vector<2xf32>
    %7 = vector.shape_cast %6 : vector<2xf32> to vector<2x1xf32>
    %8 = arith.addf %3, %4 : vector<2x1024xf32>
    %cst_4 = arith.constant dense<0.000000e+00> : vector<2xf32>
    %9 = vector.multi_reduction <add>, %8, %cst_4 [1] : vector<2x1024xf32> to vector<2xf32>
    %10 = vector.shape_cast %9 : vector<2xf32> to vector<2x1xf32>
    %11 = arith.subf %10, %7 : vector<2x1xf32>
    %12 = arith.divf %7, %11 : vector<2x1xf32>
    %cst_5 = arith.constant 1.000000e+00 : f32
    %13 = vector.broadcast %cst_5 : f32 to vector<2x1xf32>
    %14 = arith.subf %13, %12 : vector<2x1xf32>
    %c0_6 = arith.constant 0 : index
    %c0_7 = arith.constant 0 : index
    %15 = vector.load %arg3[%c0_6, %c0_7] : memref<1x128xf32, #tpu.memory_space<vmem>>, vector<1x128xf32>
    %16 = vector.shape_cast %14 : vector<2x1xf32> to vector<1x2x1xf32>
    %cst_8 = arith.constant dense<0.000000e+00> : vector<1xf32>
    %17 = vector.multi_reduction <add>, %16, %cst_8 [1, 2] : vector<1x2x1xf32> to vector<1xf32>
    %18 = vector.shape_cast %17 : vector<1xf32> to vector<1x1x1xf32>
    %19 = vector.extract %18[0, 0, 0] : f32 from vector<1x1x1xf32>
    %20 = vector.broadcast %19 : f32 to vector<1x128xf32>
    %21 = arith.addf %15, %20 : vector<1x128xf32>
    %c0_9 = arith.constant 0 : index
    %c0_10 = arith.constant 0 : index
    %22 = vector.load %arg3[%c0_9, %c0_10] : memref<1x128xf32, #tpu.memory_space<vmem>>, vector<1x128xf32>
    tpu.vector_store %arg3[%c0_9, %c0_10], %21 {strides = array<i32>} : memref<1x128xf32, #tpu.memory_space<vmem>>, vector<1x128xf32>,
    return
  }
  func.func @transform_0(%arg0: i32) -> (i32, i32) {
    %c0_i32 = arith.constant 0 : i32
    %c0_i32_0 = arith.constant 0 : i32
    return %arg0, %c0_i32 : i32, i32
  }
  func.func @transform_1(%arg0: i32) -> (i32, i32) {
    %c0_i32 = arith.constant 0 : i32
    %c0_i32_0 = arith.constant 0 : i32
    return %arg0, %c0_i32 : i32, i32
  }
  func.func @transform_2(%arg0: i32) -> (i32, i32) {
    %c0_i32 = arith.constant 0 : i32
    %c0_i32_0 = arith.constant 0 : i32
    %c0_i32_1 = arith.constant 0 : i32
    return %c0_i32, %c0_i32_0 : i32, i32
  }
}

</mosaic_0001>

<llo_original>
// kernel: patch_iou_loss.1
$region0: #{patch_iou_loss.1}
  #allocation0 [shape = 'u32[]', space=smem, size = 0x4, offset = 0x4, fixed_abs, tag = 'smem constant byte address 0x4 - core index']
  #allocation1 [shape = 'u32[72,128]{1,0:T(1,128)}', space=vmem, size = 0x9000, scoped, tag = 'internal scratch']
  %s0 = inlined_call_operand.vmem [shape: f32[2,1024], index: 0, kind: input, shape index: {}]
  %s1 = inlined_call_operand.vmem [shape: f32[2,1024], index: 1, kind: input, shape index: {}]
  %s2 = inlined_call_operand.hbm [shape: f32[1,128], index: 2, kind: output, shape index: {}]
  %s3 = sld [smem:[#allocation0]]
  $region22: #{patch_iou_loss.1} parent=0
    _
  %s5 = ssub.s32 1, %s3
  %s6 = scalar_select 0, %s5, %s3
  $region1: #{patch_iou_loss.1} parent=0
    #allocation2 [shape = 'u8[512]{0}', space=vmem, size = 0x400, scoped, tag = 'output window, operand 0, single buffered']
    #allocation3 [shape = 's32[1]{0}', space=sflag, size = 0x4, scoped, tag = 'scoped memory for patch_iou_loss.1']
    %7 = vsyncpa [#allocation3], 0
    // Predicated region
    $region2: #{patch_iou_loss.1} parent=1 // pred_check
      _
    $region3: #{patch_iou_loss.1} parent=1 // pred_check_branch
      %9 = sbr.rel (0) target = $region5
    $region4: #{patch_iou_loss.1} parent=1 // pred_region
      _
    $region5: #{patch_iou_loss.1} parent=1 // pred_fallthru
      _
    // Predicated region
    $region6: #{patch_iou_loss.1} parent=1 // pred_check
      _
    $region7: #{patch_iou_loss.1} parent=1 // pred_check_branch
      %11 = sbr.rel (0) target = $region9
    $region8: #{patch_iou_loss.1} parent=1 // pred_region
      _
    $region9: #{patch_iou_loss.1} parent=1 // pred_fallthru
      _
    %p12 = scmp.eq.s32.totalorder 0, 0
    // Predicated region
    $region10: #{patch_iou_loss.1} parent=1 // pred_check
      %p13 = pneg %p12
    $region11: #{patch_iou_loss.1} parent=1 // pred_check_branch
      %15 = sbr.rel (%p13) target = $region13
    $region12: #{patch_iou_loss.1} parent=1 // pred_region
      %16 = vst [vmem:[#allocation2] sm:$0x1] 0.0
    $region13: #{patch_iou_loss.1} parent=1 // pred_fallthru
      _
    %v17 = vld [vmem:[%s0] sm:$0xff]
    %v18 = vld [vmem:[%s0 + $0x8] sm:$0xff]
    %v19 = vld [vmem:[%s1] sm:$0xff]
    %v20 = vld [vmem:[%s1 + $0x8] sm:$0xff]
    %v21 = vmul.f32 %v17, %v19
    %v22 = vmul.f32 %v18, %v20
    %25 = vst [vmem:[#allocation1] ss:$4 sm:$0xff] %v21
    %s26 = scalar_lea.vmem [#allocation1], 32
    %27 = vst [vmem:[%s26] ss:$4 sm:$0xff] %v22
    %v28 = vld.sshfl [vmem:[#allocation1] sm:$0xff pattern:$0x73625140]
    %v29 = vld.sshfl [vmem:[#allocation1 + $0x8] sm:$0xff pattern:$0x73625140]
    %v30 = vld.sshfl [vmem:[#allocation1 + $0x10] sm:$0xff pattern:$0x73625140]
    %v31 = vld.sshfl [vmem:[#allocation1 + $0x18] sm:$0xff pattern:$0x73625140]
    %v32 = vld.sshfl [vmem:[#allocation1 + $0x20] sm:$0xff pattern:$0x73625140]
    %v33 = vld.sshfl [vmem:[#allocation1 + $0x28] sm:$0xff pattern:$0x73625140]
    %v34 = vld.sshfl [vmem:[#allocation1 + $0x30] sm:$0xff pattern:$0x73625140]
    %v35 = vld.sshfl [vmem:[#allocation1 + $0x38] sm:$0xff pattern:$0x73625140]
    %vm44 = vcmask 1041408
    %v45 = vsel %vm44, %v28, 0.0
    %v46 = vsel %vm44, %v29, 0.0
    %v47 = vadd.f32 %v45, %v46
    %v48 = vsel %vm44, %v30, 0.0
    %v49 = vadd.f32 %v47, %v48
    %v50 = vsel %vm44, %v31, 0.0
    %v51 = vadd.f32 %v49, %v50
    %v52 = vsel %vm44, %v32, 0.0
    %v53 = vadd.f32 %v51, %v52
    %v54 = vsel %vm44, %v33, 0.0
    %v55 = vadd.f32 %v53, %v54
    %v56 = vsel %vm44, %v34, 0.0
    %v57 = vadd.f32 %v55, %v56
    %v58 = vsel %vm44, %v35, 0.0
    %v59 = vadd.f32 %v57, %v58
    %60 = vadd.xlane.f32.xlu0 %v59
    %v61 = vpop.xlane.xlu0 %60
    %v62 = vadd.f32 %v17, %v19
    %v63 = vadd.f32 %v18, %v20
    %66 = vst [vmem:[#allocation1] ss:$4 sm:$0xff] %v62
    %s67 = scalar_lea.vmem [#allocation1], 32
    %68 = vst [vmem:[%s67] ss:$4 sm:$0xff] %v63
    %v69 = vld.sshfl [vmem:[#allocation1] sm:$0xff pattern:$0x73625140]
    %v70 = vld.sshfl [vmem:[#allocation1 + $0x8] sm:$0xff pattern:$0x73625140]
    %v71 = vld.sshfl [vmem:[#allocation1 + $0x10] sm:$0xff pattern:$0x73625140]
    %v72 = vld.sshfl [vmem:[#allocation1 + $0x18] sm:$0xff pattern:$0x73625140]
    %v73 = vld.sshfl [vmem:[#allocation1 + $0x20] sm:$0xff pattern:$0x73625140]
    %v74 = vld.sshfl [vmem:[#allocation1 + $0x28] sm:$0xff pattern:$0x73625140]
    %v75 = vld.sshfl [vmem:[#allocation1 + $0x30] sm:$0xff pattern:$0x73625140]
    %v76 = vld.sshfl [vmem:[#allocation1 + $0x38] sm:$0xff pattern:$0x73625140]
    %v85 = vsel %vm44, %v69, 0.0
    %v86 = vsel %vm44, %v70, 0.0
    %v87 = vadd.f32 %v85, %v86
    %v88 = vsel %vm44, %v71, 0.0
    %v89 = vadd.f32 %v87, %v88
    %v90 = vsel %vm44, %v72, 0.0
    %v91 = vadd.f32 %v89, %v90
    %v92 = vsel %vm44, %v73, 0.0
    %v93 = vadd.f32 %v91, %v92
    %v94 = vsel %vm44, %v74, 0.0
    %v95 = vadd.f32 %v93, %v94
    %v96 = vsel %vm44, %v75, 0.0
    %v97 = vadd.f32 %v95, %v96
    %v98 = vsel %vm44, %v76, 0.0
    %v99 = vadd.f32 %v97, %v98
    %100 = vadd.xlane.f32.xlu0 %v99
    %v101 = vpop.xlane.xlu0 %100
    %v102 = vsub.f32 %v101, %v61
    %v103 = vrcp.pop %v102
    %v104 = vmul.f32 %v102, %v103
    %v105 = vsub.f32 1.0, %v104
    %v106 = vmul.f32 %v103, %v105
    %v107 = vadd.f32 %v103, %v106
    %vm108 = vweird.f32 %v102
    %vm109 = vweird.f32 %v103
    %vm110 = vmor %vm108, %vm109
    %v111 = vsel %vm110, %v103, %v107
    %v112 = vand.u32 2147483647, %v102
    %vm113 = vcmp.eq.f32.partialorder %v112, 8.507059e+37
    %v114 = vand.u32 %v102, 2147483648
    %v115 = vor.u32 1.1754944e-38, %v114
    %v116 = vsel %vm113, %v115, %v111
    %v117 = vmul.f32 %v61, %v116
    %v118 = vsub.f32 1.0, %v117
    %v119 = vld [vmem:[#allocation2] sm:$0x1]
    %vm120 = vcmask 1024
    %v121 = vsel %vm120, %v118, 0.0
    %122 = vadd.xlane.f32.xlu0 %v121
    %v123 = vpop.xlane.xlu0 %122
    %v124 = vrot.slane %v123, 4
    %v125 = vadd.f32 %v123, %v124
    %v126 = vrot.slane %v125, 2
    %v127 = vadd.f32 %v125, %v126
    %v128 = vrot.slane %v127, 1
    %v129 = vadd.f32 %v127, %v128
    %s130 = vtos %v129
    %v131 = vstv %s130
    %v132 = vadd.f32 %v119, %v131
    %133 = vst [vmem:[#allocation2] sm:$0x1] %v132
    // Predicated region
    $region14: #{patch_iou_loss.1} parent=1 // pred_check
      _
    $region15: #{patch_iou_loss.1} parent=1 // pred_check_branch
      %135 = sbr.rel (0) target = $region17
    $region16: #{patch_iou_loss.1} parent=1 // pred_region
      %137 = vsyncadd [#allocation3], 0
      %s139 = sshll.u32 [#allocation2], 4
      %s140 = int_to_ptr.vmem [resolvable:$true] %s139
      %s141 = sshll.u32 %s2, 4
      %s142 = int_to_ptr.hbm [resolvable:$true] %s141
      %144 = dma.vmem_to_hbm [thread:$0]  %s140, 16, %s142, [#allocation3]
    $region17: #{patch_iou_loss.1} parent=1 // pred_fallthru
      _
    // Predicated region
    $region18: #{patch_iou_loss.1} parent=1 // pred_check
      _
    $region19: #{patch_iou_loss.1} parent=1 // pred_check_branch
      %146 = sbr.rel (0) target = $region21
    $region20: #{patch_iou_loss.1} parent=1 // pred_region
      %148 = dma.done [#allocation3], 16
    $region21: #{patch_iou_loss.1} parent=1 // pred_fallthru
      _
    %149 = vsyncpa [#allocation3], 1

</llo_original>
